<compile_context>
chip_gen: v7x
topology: tpu7x:2x2x1
jax: 0.10.0
libtpu: 0.0.40
codegen_flags: <defaults>
</compile_context>

<pallas_src>
import math
from functools import partial

import numpy as np

import jax
import jax.numpy as jnp
from jax.experimental import pallas as pl
from jax.experimental.pallas import tpu as pltpu


_TM_MAX = 512  # cap on the M tile; grid-M collapses to 1 whenever B <= 512


# ----------------------------- Pallas kernels ------------------------------

def _lin2d_single_kernel(x_ref, w_ref, o_ref):
    # Whole reduction in one MXU contraction per output tile.
    o_ref[...] = jnp.dot(
        x_ref[...], w_ref[...], preferred_element_type=jnp.float32
    ).astype(o_ref.dtype)


def _lin2d_single_bias_kernel(x_ref, w_ref, b_ref, o_ref):
    acc = jnp.dot(x_ref[...], w_ref[...], preferred_element_type=jnp.float32)
    o_ref[...] = (acc + b_ref[...].astype(jnp.float32)).astype(o_ref.dtype)


def _lin2d_multik_kernel(x_ref, w_ref, o_ref):
    # o_ref is f32 and resident across the k axis (o_spec ignores k):
    # accumulate directly into it -- no scratch, no epilogue copy.
    @pl.when(pl.program_id(2) == 0)
    def _():
        o_ref[...] = jnp.zeros_like(o_ref)

    o_ref[...] += jnp.dot(
        x_ref[...], w_ref[...], preferred_element_type=jnp.float32
    )


def _lin2d_multik_bias_kernel(x_ref, w_ref, b_ref, o_ref):
    # Bias folded into the k == 0 init (off the critical writeback path).
    @pl.when(pl.program_id(2) == 0)
    def _():
        o_ref[...] = jnp.broadcast_to(
            b_ref[...].astype(jnp.float32), o_ref.shape
        )

    o_ref[...] += jnp.dot(
        x_ref[...], w_ref[...], preferred_element_type=jnp.float32
    )


# ------------------------------- helpers ------------------------------------

def _round_up(a, b):
    return ((a + b - 1) // b) * b


def _cdiv(a, b):
    return (a + b - 1) // b


def _vmem_capacity_bytes():
    """Physical VMEM of the current TPU; conservative fallback if unknown."""
    try:
        cap = int(pltpu.get_tpu_info().vmem_capacity_bytes)
        if cap > 0:
            return cap
    except Exception:
        pass
    return 64 * 1024 * 1024  # v7x per-TC size: safe lower bound everywhere


def _select_nk_tiles(I, JK, *, tm_budget, in_itemsize, vmem_budget):
    """Pick (tn, tk): the largest lane-dense tiles whose double-buffered
    working set fits the VMEM budget, preferring the fewest grid steps
    (collapse the K reduction axis, then big tn), while keeping >= 2 N tiles
    for megacore whenever J*K is large enough."""
    I_full = _round_up(I, 128)
    JK_full = _round_up(JK, 128)

    # Keep at least two N tiles (v7x has 2 TensorCores) once JK allows it.
    tn_cap = JK_full if JK_full < 256 else _round_up(_cdiv(JK_full, 2), 128)
    tn_cands = sorted(
        {c for c in (tn_cap, 2048, 1024, 512, 256, 128) if c <= tn_cap},
        reverse=True)
    tk_cands = sorted(
        {c for c in (I_full, 2048, 1024, 512, 256, 128) if c <= I_full},
        reverse=True)

    def working_set(tn, tk):
        # 2x-buffered x & w input blocks + 2x-buffered f32 output block.
        return (2 * (tm_budget * tk + tk * tn) * in_itemsize
                + 2 * tm_budget * tn * 4)

    best = None
    for tk in tk_cands:
        kt = _cdiv(I_full, tk)
        for tn in tn_cands:
            if working_set(tn, tk) > vmem_budget:
                continue
            nt = _cdiv(JK, tn)
            key = (nt * kt, -tn, -tk)  # fewest grid steps, then biggest tiles
            if best is None or key < best[0]:
                best = (key, tn, tk)
    if best is None:
        return 128, 128
    return best[1], best[2]


# ------------------------------- wrapper ------------------------------------

def make_linear2d(weights, bias=None, *, max_batch=_TM_MAX, compute_dtype=None,
                  tn=None, tk=None):
    """Prepare Linear2D.forward as a Pallas TPU kernel.

    The weight flatten + pad and the tile choice happen here, ONCE, outside
    the per-call hot path (they are constant per layer).  The returned
    forward(x) only pads x and calls pallas_call; it is jit-friendly.

    weights: (I, J, K); bias: (1, J, K) or None.
    forward(x): (B, I) -> (B, J, K)
    compute_dtype: optionally cast x/W (e.g. jnp.bfloat16) to halve HBM
    traffic; accumulation stays f32 via preferred_element_type.
    """
    I, J, K = weights.shape
    JK = J * K

    in_dtype = np.dtype(compute_dtype) if compute_dtype is not None \
        else np.dtype(weights.dtype)
    in_itemsize = in_dtype.itemsize
    # Sub-32-bit dtypes pack along sublanes -> bump the M-tile alignment.
    m_align = 8 * max(1, 4 // in_itemsize)

    capacity = _vmem_capacity_bytes()
    vmem_budget = capacity // 2                         # working-set budget
    vmem_limit = min(int(capacity * 7 // 10), 100 * 1024 * 1024)

    tm_cap = min(_round_up(max_batch, m_align), _TM_MAX)

    if tn is None or tk is None:
        tn_sel, tk_sel = _select_nk_tiles(
            I, JK, tm_budget=tm_cap, in_itemsize=in_itemsize,
            vmem_budget=vmem_budget)
        tn = tn if tn is not None else tn_sel
        tk = tk if tk is not None else tk_sel
    tn = _round_up(int(tn), 128)
    tk = _round_up(int(tk), 128)

    I_p = _round_up(I, tk)
    JK_p = _round_up(JK, tn)

    # Flatten & pad the weight ONCE (avoids a per-call full-weight copy).
    w_p = weights.reshape(I, JK)
    if (I_p, JK_p) != (I, JK):
        w_p = jnp.pad(w_p, ((0, I_p - I), (0, JK_p - JK)))
    if compute_dtype is not None:
        w_p = w_p.astype(compute_dtype)

    b_p = None
    if bias is not None:
        b_p = bias.reshape(1, JK).astype(jnp.float32)
        if JK_p != JK:
            b_p = jnp.pad(b_p, ((0, 0), (0, JK_p - JK)))

    grid_n = JK_p // tn
    grid_k = I_p // tk

    def forward(x):
        B, I_x = x.shape
        assert I_x == I, f"expected x.shape[-1] == {I}, got {I_x}"
        out_dtype = x.dtype

        # One M tile whenever B fits the cap -> weights stream from HBM once.
        B_a = _round_up(B, m_align)
        m_tiles = _cdiv(B_a, tm_cap)
        tm = _round_up(_cdiv(B_a, m_tiles), m_align)
        B_p = _round_up(B, tm)
        grid_m = B_p // tm

        x_p = x
        if (B_p, I_p) != (B, I):
            x_p = jnp.pad(x_p, ((0, B_p - B), (0, I_p - I)))
        if compute_dtype is not None:
            x_p = x_p.astype(compute_dtype)

        if grid_k == 1:
            # Whole reduction fits: 2D grid, no accumulation loop at all.
            grid = (grid_m, grid_n)
            x_spec = pl.BlockSpec((tm, tk), lambda i, j: (i, 0))
            w_spec = pl.BlockSpec((tk, tn), lambda i, j: (0, j))
            b_spec = pl.BlockSpec((1, tn), lambda i, j: (0, j))
            o_spec = pl.BlockSpec((tm, tn), lambda i, j: (i, j))
            semantics = ("parallel", "parallel")
            call_dtype = out_dtype
            kernel = (_lin2d_single_bias_kernel if b_p is not None
                      else _lin2d_single_kernel)
        else:
            # Reduction (I) axis last; f32 output block resident across k.
            grid = (grid_m, grid_n, grid_k)
            x_spec = pl.BlockSpec((tm, tk), lambda i, j, k: (i, k))
            w_spec = pl.BlockSpec((tk, tn), lambda i, j, k: (k, j))
            b_spec = pl.BlockSpec((1, tn), lambda i, j, k: (0, j))
            o_spec = pl.BlockSpec((tm, tn), lambda i, j, k: (i, j))
            semantics = ("parallel", "parallel", "arbitrary")
            call_dtype = jnp.float32
            kernel = (_lin2d_multik_bias_kernel if b_p is not None
                      else _lin2d_multik_kernel)

        in_specs = [x_spec, w_spec]
        args = [x_p, w_p]
        if b_p is not None:
            in_specs.append(b_spec)
            args.append(b_p)

        out2d = pl.pallas_call(
            kernel,
            out_shape=jax.ShapeDtypeStruct((B_p, JK_p), call_dtype),
            grid_spec=pltpu.PrefetchScalarGridSpec(
                num_scalar_prefetch=0,
                grid=grid,
                in_specs=in_specs,
                out_specs=o_spec,
            ),
            compiler_params=pltpu.CompilerParams(
                dimension_semantics=semantics,
                vmem_limit_bytes=vmem_limit,
            ),
        )(*args)

        out = out2d[:B, :JK].reshape(B, J, K)
        return out if out.dtype == out_dtype else out.astype(out_dtype)

    return forward


def linear2d_forward(x, weights, bias=None, **kwargs):
    """One-shot convenience wrapper (prep + forward).  For repeated calls,
    build the forward once with make_linear2d() so the weight pad/flatten
    stays out of the per-call hot path."""
    return make_linear2d(weights, bias, **kwargs)(x)


# -------------------------- deterministic params -----------------------------

def init_linear2d_params(key, input_dim, hidden_dim, n_modules, bias=False):
    """Mimics nn.init.xavier_normal_ on a (I, J, K) tensor."""
    kw, kb = jax.random.split(key)
    fan_in = hidden_dim * n_modules
    fan_out = input_dim * n_modules
    std_w = math.sqrt(2.0 / (fan_in + fan_out))
    weights = std_w * jax.random.normal(
        kw, (input_dim, hidden_dim, n_modules), dtype=jnp.float32)
    b = None
    if bias:
        std_b = math.sqrt(2.0 / (hidden_dim * n_modules + n_modules))
        b = std_b * jax.random.normal(
            kb, (1, hidden_dim, n_modules), dtype=jnp.float32)
    return weights, b


# ---------------------------------- main -------------------------------------

if __name__ == "__main__":
    key = jax.random.PRNGKey(0)
    k1, k2, k3, k4 = jax.random.split(key, 4)

    # --- Test 1: small module shapes (B=2, I=8, J=16, K=4), no bias.
    # Single grid step, store-only kernel.
    B, INPUT_DIM, HIDDEN_DIM, N_MODULES = 2, 8, 16, 4
    x = jax.random.normal(k1, (B, INPUT_DIM), dtype=jnp.float32)
    w, _ = init_linear2d_params(k2, INPUT_DIM, HIDDEN_DIM, N_MODULES, bias=False)

    fwd = jax.jit(make_linear2d(w))
    out = jax.block_until_ready(fwd(x))
    ref = jnp.einsum("bi,ijk->bjk", x, w)
    assert out.shape == (B, HIDDEN_DIM, N_MODULES)
    assert jnp.allclose(out, ref, atol=1e-5, rtol=1e-5)

    # --- Test 2: larger shapes + bias.  Auto tiles -> M grid collapsed to 1,
    # whole-I reduction (no K grid axis), N split into 2 tiles for megacore.
    B2, I2, J2, K2 = 64, 512, 128, 4
    x2 = jax.random.normal(k3, (B2, I2), dtype=jnp.float32)
    w2, b2 = init_linear2d_params(k4, I2, J2, K2, bias=True)

    fwd2 = jax.jit(make_linear2d(w2, b2))
    out2 = jax.block_until_ready(fwd2(x2))
    ref2 = jnp.einsum("bi,ijk->bjk", x2, w2) + b2
    assert out2.shape == (B2, J2, K2)
    assert jnp.allclose(out2, ref2, atol=1e-4, rtol=1e-4)

    # --- Test 3: force small tn/tk so the multi-K-step path runs (f32
    # accumulation directly in the resident output block, bias folded into
    # the k == 0 init).
    fwd3 = jax.jit(make_linear2d(w2, b2, tn=256, tk=128))
    out3 = jax.block_until_ready(fwd3(x2))
    assert jnp.allclose(out3, ref2, atol=1e-4, rtol=1e-4)

    # --- Test 4: one-shot convenience wrapper still matches.
    out4 = jax.block_until_ready(linear2d_forward(x, w))
    assert jnp.allclose(out4, ref, atol=1e-5, rtol=1e-5)

    print("KERNEL_OK")
</pallas_src>

<mosaic_0001>
module attributes {stable_mosaic.version = 11 : i64} {
  func.func @_lin2d_single_kernel(%arg0: i32, %arg1: i32, %arg2: memref<8x128xf32, #tpu.memory_space<vmem>>, %arg3: memref<128x128xf32, #tpu.memory_space<vmem>>, %arg4: memref<8x128xf32, #tpu.memory_space<vmem>>) attributes {dimension_semantics = [#tpu.dimension_semantics<parallel>, #tpu.dimension_semantics<parallel>], iteration_bounds = array<i64: 1, 1>, scalar_prefetch = 0 : i64, scratch_operands = 0 : i64, tpu.core_type = #tpu.core_type<tc>, window_params = [{transform_indices = @transform_0, window_bounds = array<i64: 8, 128>}, {transform_indices = @transform_1, window_bounds = array<i64: 128, 128>}, {transform_indices = @transform_2, window_bounds = array<i64: 8, 128>}]} {
    %c0 = arith.constant 0 : index
    %c0_0 = arith.constant 0 : index
    %0 = vector.load %arg2[%c0, %c0_0] : memref<8x128xf32, #tpu.memory_space<vmem>>, vector<8x128xf32>
    %c0_1 = arith.constant 0 : index
    %c0_2 = arith.constant 0 : index
    %1 = vector.load %arg3[%c0_1, %c0_2] : memref<128x128xf32, #tpu.memory_space<vmem>>, vector<128x128xf32>
    %cst = arith.constant dense<0.000000e+00> : vector<8x128xf32>
    %2 = tpu.matmul %0, %1, %cst {dimension_numbers = #tpu.dot_dimension_numbers<[1], [0], [0], [1], [0, 0, 1, 1], [], []>} : vector<8x128xf32>, vector<128x128xf32>, vector<8x128xf32> -> vector<8x128xf32>
    %c0_3 = arith.constant 0 : index
    %c0_4 = arith.constant 0 : index
    %3 = vector.load %arg4[%c0_3, %c0_4] : memref<8x128xf32, #tpu.memory_space<vmem>>, vector<8x128xf32>
    tpu.vector_store %arg4[%c0_3, %c0_4], %2 {strides = array<i32>} : memref<8x128xf32, #tpu.memory_space<vmem>>, vector<8x128xf32>,
    return
  }
  func.func @transform_0(%arg0: i32, %arg1: i32) -> (i32, i32) {
    %c0_i32 = arith.constant 0 : i32
    %c0_i32_0 = arith.constant 0 : i32
    return %arg0, %c0_i32 : i32, i32
  }
  func.func @transform_1(%arg0: i32, %arg1: i32) -> (i32, i32) {
    %c0_i32 = arith.constant 0 : i32
    %c0_i32_0 = arith.constant 0 : i32
    return %c0_i32, %arg1 : i32, i32
  }
  func.func @transform_2(%arg0: i32, %arg1: i32) -> (i32, i32) {
    %c0_i32 = arith.constant 0 : i32
    return %arg0, %arg1 : i32, i32
  }
}

</mosaic_0001>

<llo_original>
// kernel: forward.1
$region0: #{forward.1}
  #allocation0 [shape = 'u32[]', space=smem, size = 0x4, offset = 0x4, fixed_abs, tag = 'smem constant byte address 0x4 - core index']
  #allocation1 [shape = 'u32[144,128]{1,0:T(1,128)}', space=vmem, size = 0x12000, scoped, tag = 'internal scratch']
  %s0 = inlined_call_operand.vmem [shape: f32[8,128], index: 0, kind: input, shape index: {}]
  %s1 = inlined_call_operand.hbm [shape: f32[128,128], index: 1, kind: input, shape index: {}]
  %s2 = inlined_call_operand.vmem [shape: f32[8,128], index: 2, kind: output, shape index: {}]
  %s3 = sld [smem:[#allocation0]]
  $region22: #{forward.1} parent=0
    _
  %s5 = ssub.s32 1, %s3
  %s6 = scalar_select 0, %s5, %s3
  $region1: #{forward.1} parent=0
    #allocation2 [shape = 'u8[65536]{0}', space=vmem, size = 0x10000, scoped, tag = 'input window, operand 1, single buffered']
    #allocation3 [shape = 's32[1]{0}', space=sflag, size = 0x4, scoped, tag = 'scoped memory for forward.1']
    %7 = vsyncpa [#allocation3], 0
    // Predicated region
    $region2: #{forward.1} parent=1 // pred_check
      _
    $region3: #{forward.1} parent=1 // pred_check_branch
      %9 = sbr.rel (0) target = $region5
    $region4: #{forward.1} parent=1 // pred_region
      _
    $region5: #{forward.1} parent=1 // pred_fallthru
      _
    // Predicated region
    $region6: #{forward.1} parent=1 // pred_check
      _
    $region7: #{forward.1} parent=1 // pred_check_branch
      %11 = sbr.rel (0) target = $region9
    $region8: #{forward.1} parent=1 // pred_region
      %s13 = ssub.s32 2048, 2048
      %14 = vsyncadd [#allocation3], %s13
      %s15 = sshll.u32 [#allocation2], 4
      %s16 = int_to_ptr.vmem [resolvable:$true] %s15
      %21 = dma.hbm_to_vmem [thread:$0]  %s1, 2048, %s16, [#allocation3], 128, 128, 8
    $region9: #{forward.1} parent=1 // pred_fallthru
      _
    // Predicated region
    $region10: #{forward.1} parent=1 // pred_check
      _
    $region11: #{forward.1} parent=1 // pred_check_branch
      %23 = sbr.rel (0) target = $region13
    $region12: #{forward.1} parent=1 // pred_region
      %24 = dma.done [#allocation3], 2048
    $region13: #{forward.1} parent=1 // pred_fallthru
      _
    %v25 = vld [vmem:[%s0] sm:$0xff]
    %v26 = vld [vmem:[#allocation2] sm:$0xff]
    %v27 = vld [vmem:[#allocation2 + $0x8] sm:$0xff]
    %v28 = vld [vmem:[#allocation2 + $0x10] sm:$0xff]
    %v29 = vld [vmem:[#allocation2 + $0x18] sm:$0xff]
    %v30 = vld [vmem:[#allocation2 + $0x20] sm:$0xff]
    %v31 = vld [vmem:[#allocation2 + $0x28] sm:$0xff]
    %v32 = vld [vmem:[#allocation2 + $0x30] sm:$0xff]
    %v33 = vld [vmem:[#allocation2 + $0x38] sm:$0xff]
    %v34 = vld [vmem:[#allocation2 + $0x40] sm:$0xff]
    %v35 = vld [vmem:[#allocation2 + $0x48] sm:$0xff]
    %v36 = vld [vmem:[#allocation2 + $0x50] sm:$0xff]
    %v37 = vld [vmem:[#allocation2 + $0x58] sm:$0xff]
    %v38 = vld [vmem:[#allocation2 + $0x60] sm:$0xff]
    %v39 = vld [vmem:[#allocation2 + $0x68] sm:$0xff]
    %v40 = vld [vmem:[#allocation2 + $0x70] sm:$0xff]
    %v41 = vld [vmem:[#allocation2 + $0x78] sm:$0xff]
    %42 = vmatprep.subr.mxu0 0.0
    %43 = vmatpush1.msra.mxu0 %v26
    %44 = vmatprep.subr.mxu0 0.0
    %45 = vmatpush1.msra.mxu0 %v27
    %46 = vmatprep.subr.mxu0 0.0
    %47 = vmatpush1.msra.mxu0 %v28
    %48 = vmatprep.subr.mxu0 0.0
    %49 = vmatpush1.msra.mxu0 %v29
    %50 = vmatprep.subr.mxu0 0.0
    %51 = vmatpush1.msra.mxu0 %v30
    %52 = vmatprep.subr.mxu0 0.0
    %53 = vmatpush1.msra.mxu0 %v31
    %54 = vmatprep.subr.mxu0 0.0
    %55 = vmatpush1.msra.mxu0 %v32
    %56 = vmatprep.subr.mxu0 0.0
    %57 = vmatpush1.msra.mxu0 %v33
    %58 = vmatprep.subr.mxu0 0.0
    %59 = vmatpush1.msra.mxu0 %v34
    %60 = vmatprep.subr.mxu0 0.0
    %61 = vmatpush1.msra.mxu0 %v35
    %62 = vmatprep.subr.mxu0 0.0
    %63 = vmatpush1.msra.mxu0 %v36
    %64 = vmatprep.subr.mxu0 0.0
    %65 = vmatpush1.msra.mxu0 %v37
    %66 = vmatprep.subr.mxu0 0.0
    %67 = vmatpush1.msra.mxu0 %v38
    %68 = vmatprep.subr.mxu0 0.0
    %69 = vmatpush1.msra.mxu0 %v39
    %70 = vmatprep.subr.mxu0 0.0
    %71 = vmatpush1.msra.mxu0 %v40
    %72 = vmatprep.subr.mxu0 0.0
    %73 = vmatpush1.msra.mxu0 %v41
    %74 = vmatprep.subr.mxu0 0.0
    %75 = vmatpush1.msra.mxu0 0.0
    %76 = vmatprep.subr.mxu0 0.0
    %77 = vmatpush1.msra.mxu0 0.0
    %78 = vmatprep.subr.mxu0 0.0
    %79 = vmatpush1.msra.mxu0 0.0
    %80 = vmatprep.subr.mxu0 0.0
    %81 = vmatpush1.msra.mxu0 0.0
    %82 = vmatprep.subr.mxu0 0.0
    %83 = vmatpush1.msra.mxu0 0.0
    %84 = vmatprep.subr.mxu0 0.0
    %85 = vmatpush1.msra.mxu0 0.0
    %86 = vmatprep.subr.mxu0 0.0
    %87 = vmatpush1.msra.mxu0 0.0
    %88 = vmatprep.subr.mxu0 0.0
    %89 = vmatpush1.msra.mxu0 0.0
    %90 = vmatprep.subr.mxu0 0.0
    %91 = vmatpush1.msra.mxu0 0.0
    %92 = vmatprep.subr.mxu0 0.0
    %93 = vmatpush1.msra.mxu0 0.0
    %94 = vmatprep.subr.mxu0 0.0
    %95 = vmatpush1.msra.mxu0 0.0
    %96 = vmatprep.subr.mxu0 0.0
    %97 = vmatpush1.msra.mxu0 0.0
    %98 = vmatprep.subr.mxu0 0.0
    %99 = vmatpush1.msra.mxu0 0.0
    %100 = vmatprep.subr.mxu0 0.0
    %101 = vmatpush1.msra.mxu0 0.0
    %102 = vmatprep.subr.mxu0 0.0
    %103 = vmatpush1.msra.mxu0 0.0
    %104 = vmatprep.subr.mxu0 0.0
    %105 = vmatpush1.msra.mxu0 0.0
    %106 = vmatprep.mubr.f32.mxu0 0.0
    %107 = vmatmul.mubr.f32.gmra.mrb[0].mxu0 %v25
    %v108 = vpop.f32.mrb[0].mxu0
    %v109 = vadd.f32 0.0, %v108
    %v110 = vpop.f32.mrb[0].mxu0
    %111 = vdwg.mxu0
    %112 = vst [vmem:[%s2] sm:$0xff] %v109
    // Predicated region
    $region14: #{forward.1} parent=1 // pred_check
      _
    $region15: #{forward.1} parent=1 // pred_check_branch
      %114 = sbr.rel (0) target = $region17
    $region16: #{forward.1} parent=1 // pred_region
      _
    $region17: #{forward.1} parent=1 // pred_fallthru
      _
    // Predicated region
    $region18: #{forward.1} parent=1 // pred_check
      _
    $region19: #{forward.1} parent=1 // pred_check_branch
      %116 = sbr.rel (0) target = $region21
    $region20: #{forward.1} parent=1 // pred_region
      _
    $region21: #{forward.1} parent=1 // pred_fallthru
      _
    %117 = vsyncpa [#allocation3], 1

</llo_original>
